<compile_context>
chip_gen: v7x
topology: tpu7x:2x2x1
jax: 0.10.0
libtpu: 0.0.40
codegen_flags: <defaults>
</compile_context>

<pallas_src>
import functools

import jax
import jax.numpy as jnp
from jax.experimental import pallas as pl


def _gat_kernel(scaling,
                nf_ref, ef_ref, st_ref, stT_ref, sn_ref,
                w_ref, bw_ref, we_ref, be_ref,
                wi_ref, bi_ref, wj_ref, bj_ref, wea_ref, bea_ref, ba_ref,
                expand_ref,
                node_out_ref, edge_out_ref):
    f32 = jnp.float32

    nf = nf_ref[...]                            # (N, Fn)  f32
    ef = ef_ref[...]                            # (E, Fe)  f32
    st = st_ref[...].astype(f32)                # (E, N)   one-hot target selector
    stT = stT_ref[...].astype(f32)              # (N, E)   transposed (scatter-add)
    sn = sn_ref[...].astype(f32)                # (E, N)   one-hot neighbor selector
    expand = expand_ref[...]                    # (H, H*D) block indicator

    # fused multi-head linear layers
    h = jnp.dot(nf, w_ref[...], preferred_element_type=f32) + bw_ref[...]    # (N, H*D)
    eh = jnp.dot(ef, we_ref[...], preferred_element_type=f32) + be_ref[...]  # (E, H*D)

    # attention logits with the attention vectors folded into the weights:
    #   li[n, h] = (W_h x_n + b_h) . a_i^h     (target term, per node)
    #   lj[n, h] = (W_h x_n + b_h) . a_j^h     (neighbor term, per node)
    #   le[e, h] = (We_h e_e + be_h) . a_e^h   (edge term, per edge)
    li = jnp.dot(nf, wi_ref[...], preferred_element_type=f32) + bi_ref[...]    # (N, H)
    lj = jnp.dot(nf, wj_ref[...], preferred_element_type=f32) + bj_ref[...]    # (N, H)
    le = jnp.dot(ef, wea_ref[...], preferred_element_type=f32) + bea_ref[...]  # (E, H)

    logit = (jnp.dot(st, li, preferred_element_type=f32)
             + jnp.dot(sn, lj, preferred_element_type=f32)
             + le + ba_ref[...])                                               # (E, H)
    logit = jnp.where(logit > 0, logit, scaling * logit)                       # leaky relu

    # segment softmax over edges grouped by target node.  Stabilized with a
    # per-head global max (softmax is exactly invariant to the shift), with the
    # per-target reduction and gather-back done as MXU dots.
    gmax = jnp.max(logit, axis=0, keepdims=True)                               # (1, H)
    expe = jnp.exp(logit - gmax)                                               # (E, H)
    den_n = jnp.dot(stT, expe, preferred_element_type=f32)                     # (N, H)
    den_e = jnp.dot(st, den_n, preferred_element_type=f32)                     # (E, H)
    alpha = expe * pl.reciprocal(den_e, approx=False)                          # (E, H)

    # messages: broadcast per-head alpha over its D feature lanes via a tiny
    # block-indicator matmul, weight neighbor features, scatter-add + residual.
    h_j = jnp.dot(sn, h, preferred_element_type=f32)                           # (E, H*D)
    msg = jnp.dot(alpha, expand, preferred_element_type=f32) * h_j             # (E, H*D)
    out = jnp.dot(stT, msg, preferred_element_type=f32) + h                    # (N, H*D)

    # apply_act=True in MultiHeadEdgeGATLayer -> ELU (alpha = 1)
    node_out_ref[...] = jnp.where(out > 0, out, jnp.exp(out) - 1.0)
    edge_out_ref[...] = jnp.where(eh > 0, eh, jnp.exp(eh) - 1.0)


def multi_head_edge_gat(node_features, edge_features, edge_index, params,
                        scaling=0.2):
    N, Fn = node_features.shape
    E, Fe = edge_features.shape
    H, _, D = params["w"].shape
    HD = H * D

    # one-hot selectors (bf16 is exact for {0, 1}; halves their footprint)
    tgt = edge_index[0]
    nbr = edge_index[1]
    st = jax.nn.one_hot(tgt, N, dtype=jnp.bfloat16)    # (E, N)
    sn = jax.nn.one_hot(nbr, N, dtype=jnp.bfloat16)    # (E, N)
    stT = st.T                                         # (N, E)

    # fold all heads into the feature axis (column block h*D:(h+1)*D = head h)
    w_all = jnp.transpose(params["w"], (1, 0, 2)).reshape(Fn, HD)
    bw_all = params["bw"].reshape(1, HD)
    we_all = jnp.transpose(params["we"], (1, 0, 2)).reshape(Fe, HD)
    be_all = params["be"].reshape(1, HD)

    # fold attention vectors into the linear weights (trace-time algebra)
    ai = params["ai"][..., 0]                          # (H, D)
    aj = params["aj"][..., 0]
    ae = params["ae"][..., 0]
    wi = jnp.einsum("hfd,hd->fh", params["w"], ai)     # (Fn, H)
    bi = jnp.einsum("hod,hd->oh", params["bw"], ai)    # (1, H)
    wj = jnp.einsum("hfd,hd->fh", params["w"], aj)     # (Fn, H)
    bj = jnp.einsum("hod,hd->oh", params["bw"], aj)    # (1, H)
    wea = jnp.einsum("hfd,hd->fh", params["we"], ae)   # (Fe, H)
    bea = jnp.einsum("hod,hd->oh", params["be"], ae)   # (1, H)
    ba = params["ba"].reshape(1, H)

    # block indicator that broadcasts per-head alpha over its D feature lanes
    expand = jnp.repeat(jnp.eye(H, dtype=jnp.float32), D, axis=1)  # (H, H*D)

    kernel = functools.partial(_gat_kernel, float(scaling))
    node_out, edge_out = pl.pallas_call(
        kernel,
        out_shape=(jax.ShapeDtypeStruct((N, HD), jnp.float32),
                   jax.ShapeDtypeStruct((E, HD), jnp.float32)),
    )(node_features, edge_features, st, stT, sn,
      w_all, bw_all, we_all, be_all,
      wi, bi, wj, bj, wea, bea, ba, expand)

    # outputs are already head-concatenated along the feature axis
    return node_out, edge_out


def init_params(key, H, Fn, Fe, D):
    """Deterministic nn.Linear-style init (U(-1/sqrt(fan_in), 1/sqrt(fan_in)))."""
    ks = jax.random.split(key, 8)

    def u(k, shape, fan_in):
        bound = 1.0 / float(fan_in) ** 0.5
        return jax.random.uniform(k, shape, jnp.float32, -bound, bound)

    return dict(
        w=u(ks[0], (H, Fn, D), Fn),     # node Linear weight (transposed)
        bw=u(ks[1], (H, 1, D), Fn),     # node Linear bias
        we=u(ks[2], (H, Fe, D), Fe),    # edge Linear weight (transposed)
        be=u(ks[3], (H, 1, D), Fe),     # edge Linear bias
        ai=u(ks[4], (H, D, 1), 3 * D),  # attn weight slice for h_i
        aj=u(ks[5], (H, D, 1), 3 * D),  # attn weight slice for h_j
        ae=u(ks[6], (H, D, 1), 3 * D),  # attn weight slice for edge_h
        ba=u(ks[7], (H, 1, 1), 3 * D),  # attn bias
    )


def reference(node_features, edge_features, edge_index, params, scaling=0.2):
    """Pure-JAX reference using segment ops (mirrors the PyTorch module)."""
    N = node_features.shape[0]
    tgt, nbr = edge_index[0], edge_index[1]
    H = params["w"].shape[0]
    nodes_out, edges_out = [], []
    for hd in range(H):
        h = node_features @ params["w"][hd] + params["bw"][hd]
        eh = edge_features @ params["we"][hd] + params["be"][hd]
        h_i, h_j = h[tgt], h[nbr]
        logit = (h_i @ params["ai"][hd] + h_j @ params["aj"][hd]
                 + eh @ params["ae"][hd] + params["ba"][hd])
        logit = jnp.where(logit > 0, logit, scaling * logit)
        seg_max = jax.ops.segment_max(logit, tgt, num_segments=N)
        exp_e = jnp.exp(logit - seg_max[tgt])
        denom = jax.ops.segment_sum(exp_e, tgt, num_segments=N)
        alpha = exp_e / denom[tgt]
        out = jax.ops.segment_sum(alpha * h_j, tgt, num_segments=N) + h
        nodes_out.append(jax.nn.elu(out))
        edges_out.append(jax.nn.elu(eh))
    return jnp.concatenate(nodes_out, -1), jnp.concatenate(edges_out, -1)


if __name__ == "__main__":
    key = jax.random.PRNGKey(0)
    k_nf, k_ef, k_ei, k_p = jax.random.split(key, 4)

    N, E = 8, 16                       # nodes, edges
    Fn, Fe = 8, 4                      # node / edge input features
    Hid, heads = 32, 8                 # n_hidden_features, num_heads
    D = Hid // heads                   # head_dimension

    node_features = jax.random.normal(k_nf, (N, Fn), jnp.float32)
    edge_features = jax.random.normal(k_ef, (E, Fe), jnp.float32)
    edge_index = jax.random.randint(k_ei, (2, E), 0, N, jnp.int32)
    params = init_params(k_p, heads, Fn, Fe, D)

    node_out, edge_out = multi_head_edge_gat(
        node_features, edge_features, edge_index, params)
    jax.block_until_ready((node_out, edge_out))

    ref_n, ref_e = reference(node_features, edge_features, edge_index, params)
    assert node_out.shape == (N, Hid) and edge_out.shape == (E, Hid)
    assert jnp.allclose(node_out, ref_n, atol=1e-4, rtol=1e-4)
    assert jnp.allclose(edge_out, ref_e, atol=1e-4, rtol=1e-4)

    print("KERNEL_OK")
</pallas_src>

<mosaic_0001>
module attributes {stable_mosaic.version = 11 : i64} {
  func.func @_gat_kernel(%arg0: memref<8x8xf32, #tpu.memory_space<vmem>>, %arg1: memref<16x4xf32, #tpu.memory_space<vmem>>, %arg2: memref<16x8xbf16, #tpu.memory_space<vmem>>, %arg3: memref<8x16xbf16, #tpu.memory_space<vmem>>, %arg4: memref<16x8xbf16, #tpu.memory_space<vmem>>, %arg5: memref<8x32xf32, #tpu.memory_space<vmem>>, %arg6: memref<1x32xf32, #tpu.memory_space<vmem>>, %arg7: memref<4x32xf32, #tpu.memory_space<vmem>>, %arg8: memref<1x32xf32, #tpu.memory_space<vmem>>, %arg9: memref<8x8xf32, #tpu.memory_space<vmem>>, %arg10: memref<1x8xf32, #tpu.memory_space<vmem>>, %arg11: memref<8x8xf32, #tpu.memory_space<vmem>>, %arg12: memref<1x8xf32, #tpu.memory_space<vmem>>, %arg13: memref<4x8xf32, #tpu.memory_space<vmem>>, %arg14: memref<1x8xf32, #tpu.memory_space<vmem>>, %arg15: memref<1x8xf32, #tpu.memory_space<vmem>>, %arg16: memref<8x32xf32, #tpu.memory_space<vmem>>, %arg17: memref<8x32xf32, #tpu.memory_space<vmem>>, %arg18: memref<16x32xf32, #tpu.memory_space<vmem>>) attributes {dimension_semantics = [], scalar_prefetch = 0 : i64, scratch_operands = 0 : i64, tpu.core_type = #tpu.core_type<tc>} {
    %c0 = arith.constant 0 : index
    %c0_0 = arith.constant 0 : index
    %0 = vector.load %arg0[%c0, %c0_0] : memref<8x8xf32, #tpu.memory_space<vmem>>, vector<8x8xf32>
    %c0_1 = arith.constant 0 : index
    %c0_2 = arith.constant 0 : index
    %1 = vector.load %arg1[%c0_1, %c0_2] : memref<16x4xf32, #tpu.memory_space<vmem>>, vector<16x4xf32>
    %c0_3 = arith.constant 0 : index
    %c0_4 = arith.constant 0 : index
    %2 = vector.load %arg2[%c0_3, %c0_4] : memref<16x8xbf16, #tpu.memory_space<vmem>>, vector<16x8xbf16>
    %3 = arith.extf %2 : vector<16x8xbf16> to vector<16x8xf32>
    %c0_5 = arith.constant 0 : index
    %c0_6 = arith.constant 0 : index
    %4 = vector.load %arg3[%c0_5, %c0_6] : memref<8x16xbf16, #tpu.memory_space<vmem>>, vector<8x16xbf16>
    %5 = arith.extf %4 : vector<8x16xbf16> to vector<8x16xf32>
    %c0_7 = arith.constant 0 : index
    %c0_8 = arith.constant 0 : index
    %6 = vector.load %arg4[%c0_7, %c0_8] : memref<16x8xbf16, #tpu.memory_space<vmem>>, vector<16x8xbf16>
    %7 = arith.extf %6 : vector<16x8xbf16> to vector<16x8xf32>
    %c0_9 = arith.constant 0 : index
    %c0_10 = arith.constant 0 : index
    %8 = vector.load %arg16[%c0_9, %c0_10] : memref<8x32xf32, #tpu.memory_space<vmem>>, vector<8x32xf32>
    %c0_11 = arith.constant 0 : index
    %c0_12 = arith.constant 0 : index
    %9 = vector.load %arg5[%c0_11, %c0_12] : memref<8x32xf32, #tpu.memory_space<vmem>>, vector<8x32xf32>
    %cst = arith.constant dense<0.000000e+00> : vector<8x32xf32>
    %10 = tpu.matmul %0, %9, %cst {dimension_numbers = #tpu.dot_dimension_numbers<[1], [0], [0], [1], [0, 0, 1, 1], [], []>} : vector<8x8xf32>, vector<8x32xf32>, vector<8x32xf32> -> vector<8x32xf32>
    %c0_13 = arith.constant 0 : index
    %c0_14 = arith.constant 0 : index
    %11 = vector.load %arg6[%c0_13, %c0_14] : memref<1x32xf32, #tpu.memory_space<vmem>>, vector<1x32xf32>
    %12 = vector.broadcast %11 : vector<1x32xf32> to vector<8x32xf32>
    %13 = arith.addf %10, %12 : vector<8x32xf32>
    %c0_15 = arith.constant 0 : index
    %c0_16 = arith.constant 0 : index
    %14 = vector.load %arg7[%c0_15, %c0_16] : memref<4x32xf32, #tpu.memory_space<vmem>>, vector<4x32xf32>
    %cst_17 = arith.constant dense<0.000000e+00> : vector<16x32xf32>
    %15 = tpu.matmul %1, %14, %cst_17 {dimension_numbers = #tpu.dot_dimension_numbers<[1], [0], [0], [1], [0, 0, 1, 1], [], []>} : vector<16x4xf32>, vector<4x32xf32>, vector<16x32xf32> -> vector<16x32xf32>
    %c0_18 = arith.constant 0 : index
    %c0_19 = arith.constant 0 : index
    %16 = vector.load %arg8[%c0_18, %c0_19] : memref<1x32xf32, #tpu.memory_space<vmem>>, vector<1x32xf32>
    %17 = vector.broadcast %16 : vector<1x32xf32> to vector<16x32xf32>
    %18 = arith.addf %15, %17 : vector<16x32xf32>
    %c0_20 = arith.constant 0 : index
    %c0_21 = arith.constant 0 : index
    %19 = vector.load %arg9[%c0_20, %c0_21] : memref<8x8xf32, #tpu.memory_space<vmem>>, vector<8x8xf32>
    %cst_22 = arith.constant dense<0.000000e+00> : vector<8x8xf32>
    %20 = tpu.matmul %0, %19, %cst_22 {dimension_numbers = #tpu.dot_dimension_numbers<[1], [0], [0], [1], [0, 0, 1, 1], [], []>} : vector<8x8xf32>, vector<8x8xf32>, vector<8x8xf32> -> vector<8x8xf32>
    %c0_23 = arith.constant 0 : index
    %c0_24 = arith.constant 0 : index
    %21 = vector.load %arg10[%c0_23, %c0_24] : memref<1x8xf32, #tpu.memory_space<vmem>>, vector<1x8xf32>
    %22 = vector.broadcast %21 : vector<1x8xf32> to vector<8x8xf32>
    %23 = arith.addf %20, %22 : vector<8x8xf32>
    %c0_25 = arith.constant 0 : index
    %c0_26 = arith.constant 0 : index
    %24 = vector.load %arg11[%c0_25, %c0_26] : memref<8x8xf32, #tpu.memory_space<vmem>>, vector<8x8xf32>
    %cst_27 = arith.constant dense<0.000000e+00> : vector<8x8xf32>
    %25 = tpu.matmul %0, %24, %cst_27 {dimension_numbers = #tpu.dot_dimension_numbers<[1], [0], [0], [1], [0, 0, 1, 1], [], []>} : vector<8x8xf32>, vector<8x8xf32>, vector<8x8xf32> -> vector<8x8xf32>
    %c0_28 = arith.constant 0 : index
    %c0_29 = arith.constant 0 : index
    %26 = vector.load %arg12[%c0_28, %c0_29] : memref<1x8xf32, #tpu.memory_space<vmem>>, vector<1x8xf32>
    %27 = vector.broadcast %26 : vector<1x8xf32> to vector<8x8xf32>
    %28 = arith.addf %25, %27 : vector<8x8xf32>
    %c0_30 = arith.constant 0 : index
    %c0_31 = arith.constant 0 : index
    %29 = vector.load %arg13[%c0_30, %c0_31] : memref<4x8xf32, #tpu.memory_space<vmem>>, vector<4x8xf32>
    %cst_32 = arith.constant dense<0.000000e+00> : vector<16x8xf32>
    %30 = tpu.matmul %1, %29, %cst_32 {dimension_numbers = #tpu.dot_dimension_numbers<[1], [0], [0], [1], [0, 0, 1, 1], [], []>} : vector<16x4xf32>, vector<4x8xf32>, vector<16x8xf32> -> vector<16x8xf32>
    %c0_33 = arith.constant 0 : index
    %c0_34 = arith.constant 0 : index
    %31 = vector.load %arg14[%c0_33, %c0_34] : memref<1x8xf32, #tpu.memory_space<vmem>>, vector<1x8xf32>
    %32 = vector.broadcast %31 : vector<1x8xf32> to vector<16x8xf32>
    %33 = arith.addf %30, %32 : vector<16x8xf32>
    %cst_35 = arith.constant dense<0.000000e+00> : vector<16x8xf32>
    %34 = tpu.matmul %3, %23, %cst_35 {dimension_numbers = #tpu.dot_dimension_numbers<[1], [0], [0], [1], [0, 0, 1, 1], [], []>} : vector<16x8xf32>, vector<8x8xf32>, vector<16x8xf32> -> vector<16x8xf32>
    %cst_36 = arith.constant dense<0.000000e+00> : vector<16x8xf32>
    %35 = tpu.matmul %7, %28, %cst_36 {dimension_numbers = #tpu.dot_dimension_numbers<[1], [0], [0], [1], [0, 0, 1, 1], [], []>} : vector<16x8xf32>, vector<8x8xf32>, vector<16x8xf32> -> vector<16x8xf32>
    %36 = arith.addf %34, %35 : vector<16x8xf32>
    %37 = arith.addf %36, %33 : vector<16x8xf32>
    %c0_37 = arith.constant 0 : index
    %c0_38 = arith.constant 0 : index
    %38 = vector.load %arg15[%c0_37, %c0_38] : memref<1x8xf32, #tpu.memory_space<vmem>>, vector<1x8xf32>
    %39 = vector.broadcast %38 : vector<1x8xf32> to vector<16x8xf32>
    %40 = arith.addf %37, %39 : vector<16x8xf32>
    %cst_39 = arith.constant 0.000000e+00 : f32
    %41 = vector.broadcast %cst_39 : f32 to vector<16x8xf32>
    %42 = arith.cmpf ogt, %40, %41 : vector<16x8xf32>
    %cst_40 = arith.constant 2.000000e-01 : f32
    %43 = vector.broadcast %cst_40 : f32 to vector<16x8xf32>
    %44 = arith.mulf %43, %40 : vector<16x8xf32>
    %45 = arith.select %42, %40, %44 : vector<16x8xi1>, vector<16x8xf32>
    %cst_41 = arith.constant dense<0xFF800000> : vector<8xf32>
    %46 = vector.multi_reduction <maximumf>, %45, %cst_41 [0] : vector<16x8xf32> to vector<8xf32>
    %47 = vector.shape_cast %46 : vector<8xf32> to vector<1x8xf32>
    %48 = vector.broadcast %47 : vector<1x8xf32> to vector<16x8xf32>
    %49 = arith.subf %45, %48 : vector<16x8xf32>
    %50 = math.exp %49 : vector<16x8xf32>
    %cst_42 = arith.constant dense<0.000000e+00> : vector<8x8xf32>
    %51 = tpu.matmul %5, %50, %cst_42 {dimension_numbers = #tpu.dot_dimension_numbers<[1], [0], [0], [1], [0, 0, 1, 1], [], []>} : vector<8x16xf32>, vector<16x8xf32>, vector<8x8xf32> -> vector<8x8xf32>
    %cst_43 = arith.constant dense<0.000000e+00> : vector<16x8xf32>
    %52 = tpu.matmul %3, %51, %cst_43 {dimension_numbers = #tpu.dot_dimension_numbers<[1], [0], [0], [1], [0, 0, 1, 1], [], []>} : vector<16x8xf32>, vector<8x8xf32>, vector<16x8xf32> -> vector<16x8xf32>
    %53 = tpu.reciprocal %52 : vector<16x8xf32> -> vector<16x8xf32>
    %54 = arith.mulf %50, %53 : vector<16x8xf32>
    %cst_44 = arith.constant dense<0.000000e+00> : vector<16x32xf32>
    %55 = tpu.matmul %7, %13, %cst_44 {dimension_numbers = #tpu.dot_dimension_numbers<[1], [0], [0], [1], [0, 0, 1, 1], [], []>} : vector<16x8xf32>, vector<8x32xf32>, vector<16x32xf32> -> vector<16x32xf32>
    %cst_45 = arith.constant dense<0.000000e+00> : vector<16x32xf32>
    %56 = tpu.matmul %54, %8, %cst_45 {dimension_numbers = #tpu.dot_dimension_numbers<[1], [0], [0], [1], [0, 0, 1, 1], [], []>} : vector<16x8xf32>, vector<8x32xf32>, vector<16x32xf32> -> vector<16x32xf32>
    %57 = arith.mulf %56, %55 : vector<16x32xf32>
    %cst_46 = arith.constant dense<0.000000e+00> : vector<8x32xf32>
    %58 = tpu.matmul %5, %57, %cst_46 {dimension_numbers = #tpu.dot_dimension_numbers<[1], [0], [0], [1], [0, 0, 1, 1], [], []>} : vector<8x16xf32>, vector<16x32xf32>, vector<8x32xf32> -> vector<8x32xf32>
    %59 = arith.addf %58, %13 : vector<8x32xf32>
    %cst_47 = arith.constant 0.000000e+00 : f32
    %60 = vector.broadcast %cst_47 : f32 to vector<8x32xf32>
    %61 = arith.cmpf ogt, %59, %60 : vector<8x32xf32>
    %62 = math.exp %59 : vector<8x32xf32>
    %cst_48 = arith.constant 1.000000e+00 : f32
    %63 = vector.broadcast %cst_48 : f32 to vector<8x32xf32>
    %64 = arith.subf %62, %63 : vector<8x32xf32>
    %65 = arith.select %61, %59, %64 : vector<8x32xi1>, vector<8x32xf32>
    %c0_49 = arith.constant 0 : index
    %c0_50 = arith.constant 0 : index
    %66 = vector.load %arg17[%c0_49, %c0_50] : memref<8x32xf32, #tpu.memory_space<vmem>>, vector<8x32xf32>
    tpu.vector_store %arg17[%c0_49, %c0_50], %65 {strides = array<i32>} : memref<8x32xf32, #tpu.memory_space<vmem>>, vector<8x32xf32>,
    %cst_51 = arith.constant 0.000000e+00 : f32
    %67 = vector.broadcast %cst_51 : f32 to vector<16x32xf32>
    %68 = arith.cmpf ogt, %18, %67 : vector<16x32xf32>
    %69 = math.exp %18 : vector<16x32xf32>
    %cst_52 = arith.constant 1.000000e+00 : f32
    %70 = vector.broadcast %cst_52 : f32 to vector<16x32xf32>
    %71 = arith.subf %69, %70 : vector<16x32xf32>
    %72 = arith.select %68, %18, %71 : vector<16x32xi1>, vector<16x32xf32>
    %c0_53 = arith.constant 0 : index
    %c0_54 = arith.constant 0 : index
    %73 = vector.load %arg18[%c0_53, %c0_54] : memref<16x32xf32, #tpu.memory_space<vmem>>, vector<16x32xf32>
    tpu.vector_store %arg18[%c0_53, %c0_54], %72 {strides = array<i32>} : memref<16x32xf32, #tpu.memory_space<vmem>>, vector<16x32xf32>,
    return
  }
}

</mosaic_0001>

<llo_original>
// kernel: tpu_custom_call.1
$region0: #{tpu_custom_call.1}
  #allocation0 [shape = 'u32[]', space=smem, size = 0x4, offset = 0x4, fixed_abs, tag = 'smem constant byte address 0x4 - core index']
  #allocation1 [shape = 'u32[144,128]{1,0:T(1,128)}', space=vmem, size = 0x12000, scoped, tag = 'internal scratch']
  %s0 = inlined_call_operand.vmem [shape: f32[8,8], index: 0, kind: input, shape index: {}]
  %s1 = inlined_call_operand.vmem [shape: f32[16,4], index: 1, kind: input, shape index: {}]
  %s2 = inlined_call_operand.vmem [shape: bf16[16,8], index: 2, kind: input, shape index: {}]
  %s3 = inlined_call_operand.vmem [shape: bf16[8,16], index: 3, kind: input, shape index: {}]
  %s4 = inlined_call_operand.vmem [shape: bf16[16,8], index: 4, kind: input, shape index: {}]
  %s5 = inlined_call_operand.vmem [shape: f32[8,32], index: 5, kind: input, shape index: {}]
  %s6 = inlined_call_operand.vmem [shape: f32[1,32], index: 6, kind: input, shape index: {}]
  %s7 = inlined_call_operand.vmem [shape: f32[4,32], index: 7, kind: input, shape index: {}]
  %s8 = inlined_call_operand.vmem [shape: f32[1,32], index: 8, kind: input, shape index: {}]
  %s9 = inlined_call_operand.vmem [shape: f32[8,8], index: 9, kind: input, shape index: {}]
  %s10 = inlined_call_operand.vmem [shape: f32[1,8], index: 10, kind: input, shape index: {}]
  %s11 = inlined_call_operand.vmem [shape: f32[8,8], index: 11, kind: input, shape index: {}]
  %s12 = inlined_call_operand.vmem [shape: f32[1,8], index: 12, kind: input, shape index: {}]
  %s13 = inlined_call_operand.vmem [shape: f32[4,8], index: 13, kind: input, shape index: {}]
  %s14 = inlined_call_operand.vmem [shape: f32[1,8], index: 14, kind: input, shape index: {}]
  %s15 = inlined_call_operand.vmem [shape: f32[1,8], index: 15, kind: input, shape index: {}]
  %s16 = inlined_call_operand.vmem [shape: f32[8,32], index: 16, kind: input, shape index: {}]
  %s17 = inlined_call_operand.hbm [shape: f32[8,32], index: 17, kind: output, shape index: {0}]
  %s18 = inlined_call_operand.hbm [shape: f32[16,32], index: 18, kind: output, shape index: {1}]
  %19 = xla_tuple %s17, %s18
  %s20 = sld [smem:[#allocation0]]
  $region86: #{tpu_custom_call.1} parent=0
    _
  %s22 = ssub.s32 1, %s20
  %s23 = scalar_select 0, %s22, %s20
  $region1: #{tpu_custom_call.1} parent=0
    #allocation2 [shape = 'u8[4096]{0}', space=vmem, size = 0x1000, scoped, tag = 'output window, operand 0, single buffered']
    #allocation3 [shape = 's32[1]{0}', space=sflag, size = 0x4, scoped, tag = 'scoped memory for tpu_custom_call.1']
    #allocation4 [shape = 'u8[8192]{0}', space=vmem, size = 0x2000, scoped, tag = 'output window, operand 1, single buffered']
    #allocation5 [shape = 's32[1]{0}', space=sflag, size = 0x4, scoped, tag = 'scoped memory for tpu_custom_call.1']
    %24 = vsyncpa [#allocation3], 0
    %25 = vsyncpa [#allocation5], 0
    // Predicated region
    $region2: #{tpu_custom_call.1} parent=1 // pred_check
      _
    $region3: #{tpu_custom_call.1} parent=1 // pred_check_branch
      %27 = sbr.rel (0) target = $region5
    $region4: #{tpu_custom_call.1} parent=1 // pred_region
      _
    $region5: #{tpu_custom_call.1} parent=1 // pred_fallthru
      _
    // Predicated region
    $region6: #{tpu_custom_call.1} parent=1 // pred_check
      _
    $region7: #{tpu_custom_call.1} parent=1 // pred_check_branch
      %29 = sbr.rel (0) target = $region9
    $region8: #{tpu_custom_call.1} parent=1 // pred_region
      _
    $region9: #{tpu_custom_call.1} parent=1 // pred_fallthru
      _
    // Predicated region
    $region10: #{tpu_custom_call.1} parent=1 // pred_check
      _
    $region11: #{tpu_custom_call.1} parent=1 // pred_check_branch
      %31 = sbr.rel (0) target = $region13
    $region12: #{tpu_custom_call.1} parent=1 // pred_region
      _
    $region13: #{tpu_custom_call.1} parent=1 // pred_fallthru
      _
    // Predicated region
    $region14: #{tpu_custom_call.1} parent=1 // pred_check
      _
    $region15: #{tpu_custom_call.1} parent=1 // pred_check_branch
      %33 = sbr.rel (0) target = $region17
    $region16: #{tpu_custom_call.1} parent=1 // pred_region
      _
    $region17: #{tpu_custom_call.1} parent=1 // pred_fallthru
      _
    // Predicated region
    $region18: #{tpu_custom_call.1} parent=1 // pred_check
      _
    $region19: #{tpu_custom_call.1} parent=1 // pred_check_branch
      %35 = sbr.rel (0) target = $region21
    $region20: #{tpu_custom_call.1} parent=1 // pred_region
      _
    $region21: #{tpu_custom_call.1} parent=1 // pred_fallthru
      _
    // Predicated region
    $region22: #{tpu_custom_call.1} parent=1 // pred_check
      _
    $region23: #{tpu_custom_call.1} parent=1 // pred_check_branch
      %37 = sbr.rel (0) target = $region25
    $region24: #{tpu_custom_call.1} parent=1 // pred_region
      _
    $region25: #{tpu_custom_call.1} parent=1 // pred_fallthru
      _
    // Predicated region
    $region26: #{tpu_custom_call.1} parent=1 // pred_check
      _
    $region27: #{tpu_custom_call.1} parent=1 // pred_check_branch
      %39 = sbr.rel (0) target = $region29
    $region28: #{tpu_custom_call.1} parent=1 // pred_region
      _
    $region29: #{tpu_custom_call.1} parent=1 // pred_fallthru
      _
    // Predicated region
    $region30: #{tpu_custom_call.1} parent=1 // pred_check
      _
    $region31: #{tpu_custom_call.1} parent=1 // pred_check_branch
      %41 = sbr.rel (0) target = $region33
    $region32: #{tpu_custom_call.1} parent=1 // pred_region
      _
    $region33: #{tpu_custom_call.1} parent=1 // pred_fallthru
      _
    // Predicated region
    $region34: #{tpu_custom_call.1} parent=1 // pred_check
      _
    $region35: #{tpu_custom_call.1} parent=1 // pred_check_branch
      %43 = sbr.rel (0) target = $region37
    $region36: #{tpu_custom_call.1} parent=1 // pred_region
      _
    $region37: #{tpu_custom_call.1} parent=1 // pred_fallthru
      _
    // Predicated region
    $region38: #{tpu_custom_call.1} parent=1 // pred_check
      _
    $region39: #{tpu_custom_call.1} parent=1 // pred_check_branch
      %45 = sbr.rel (0) target = $region41
    $region40: #{tpu_custom_call.1} parent=1 // pred_region
      _
    $region41: #{tpu_custom_call.1} parent=1 // pred_fallthru
      _
    // Predicated region
    $region42: #{tpu_custom_call.1} parent=1 // pred_check
      _
    $region43: #{tpu_custom_call.1} parent=1 // pred_check_branch
      %47 = sbr.rel (0) target = $region45
    $region44: #{tpu_custom_call.1} parent=1 // pred_region
      _
    $region45: #{tpu_custom_call.1} parent=1 // pred_fallthru
      _
    // Predicated region
    $region46: #{tpu_custom_call.1} parent=1 // pred_check
      _
    $region47: #{tpu_custom_call.1} parent=1 // pred_check_branch
      %49 = sbr.rel (0) target = $region49
    $region48: #{tpu_custom_call.1} parent=1 // pred_region
      _
    $region49: #{tpu_custom_call.1} parent=1 // pred_fallthru
      _
    // Predicated region
    $region50: #{tpu_custom_call.1} parent=1 // pred_check
      _
    $region51: #{tpu_custom_call.1} parent=1 // pred_check_branch
      %51 = sbr.rel (0) target = $region53
    $region52: #{tpu_custom_call.1} parent=1 // pred_region
      _
    $region53: #{tpu_custom_call.1} parent=1 // pred_fallthru
      _
    // Predicated region
    $region54: #{tpu_custom_call.1} parent=1 // pred_check
      _
    $region55: #{tpu_custom_call.1} parent=1 // pred_check_branch
      %53 = sbr.rel (0) target = $region57
    $region56: #{tpu_custom_call.1} parent=1 // pred_region
      _
    $region57: #{tpu_custom_call.1} parent=1 // pred_fallthru
      _
    // Predicated region
    $region58: #{tpu_custom_call.1} parent=1 // pred_check
      _
    $region59: #{tpu_custom_call.1} parent=1 // pred_check_branch
      %55 = sbr.rel (0) target = $region61
    $region60: #{tpu_custom_call.1} parent=1 // pred_region
      _
    $region61: #{tpu_custom_call.1} parent=1 // pred_fallthru
      _
    // Predicated region
    $region62: #{tpu_custom_call.1} parent=1 // pred_check
      _
    $region63: #{tpu_custom_call.1} parent=1 // pred_check_branch
      %57 = sbr.rel (0) target = $region65
    $region64: #{tpu_custom_call.1} parent=1 // pred_region
      _
    $region65: #{tpu_custom_call.1} parent=1 // pred_fallthru
      _
    // Predicated region
    $region66: #{tpu_custom_call.1} parent=1 // pred_check
      _
    $region67: #{tpu_custom_call.1} parent=1 // pred_check_branch
      %59 = sbr.rel (0) target = $region69
    $region68: #{tpu_custom_call.1} parent=1 // pred_region
      _
    $region69: #{tpu_custom_call.1} parent=1 // pred_fallthru
      _
    %v60 = vld [vmem:[%s0] sm:$0xff]
    %v61 = vld [vmem:[%s1] sm:$0xff]
    %v62 = vld [vmem:[%s1 + $0x8] sm:$0xff]
    %v63 = vld [vmem:[%s2] sm:$0xf]
    %v64 = vld [vmem:[%s2 + $0x4] sm:$0xf]
    %v65 = vunpack.c.l.bf16 %v63
    %v66 = vunpack.c.l.bf16 %v64
    %v67 = vld [vmem:[%s3] sm:$0xf]
    %v68 = vunpack.c.l.bf16 %v67
    %v69 = vld [vmem:[%s4] sm:$0xf]
    %v70 = vld [vmem:[%s4 + $0x4] sm:$0xf]
    %v71 = vunpack.c.l.bf16 %v69
    %v72 = vunpack.c.l.bf16 %v70
    %v73 = vld [vmem:[%s16] sm:$0xff]
    %v74 = vld [vmem:[%s5] sm:$0xff]
    %v75 = vld [vmem:[%s6] sm:$0x1]
    %v77 = vlaneseq
    %v78 = vshrl.u32 %v77, 7
    %v79 = vsub.s32 0, %v78
    %v80 = vrot.slane %v75, %v79
    %vm82 = vcmask 64512
    %v84 = vsel %vm82, %v60, 0
    %86 = vmatprep.subr.mxu0 0.0
    %87 = vmatpush1.msra.mxu0 %v74
    %88 = vmatprep.subr.mxu0 0.0
    %89 = vmatpush1.msra.mxu0 0.0
    %90 = vmatprep.subr.mxu0 0.0
    %91 = vmatpush1.msra.mxu0 0.0
    %92 = vmatprep.subr.mxu0 0.0
    %93 = vmatpush1.msra.mxu0 0.0
    %94 = vmatprep.subr.mxu0 0.0
    %95 = vmatpush1.msra.mxu0 0.0
    %96 = vmatprep.subr.mxu0 0.0
    %97 = vmatpush1.msra.mxu0 0.0
    %98 = vmatprep.subr.mxu0 0.0
    %99 = vmatpush1.msra.mxu0 0.0
    %100 = vmatprep.subr.mxu0 0.0
    %101 = vmatpush1.msra.mxu0 0.0
    %102 = vmatprep.subr.mxu0 0.0
    %103 = vmatpush1.msra.mxu0 0.0
    %104 = vmatprep.subr.mxu0 0.0
    %105 = vmatpush1.msra.mxu0 0.0
    %106 = vmatprep.subr.mxu0 0.0
    %107 = vmatpush1.msra.mxu0 0.0
    %108 = vmatprep.subr.mxu0 0.0
    %109 = vmatpush1.msra.mxu0 0.0
    %110 = vmatprep.subr.mxu0 0.0
    %111 = vmatpush1.msra.mxu0 0.0
    %112 = vmatprep.subr.mxu0 0.0
    %113 = vmatpush1.msra.mxu0 0.0
    %114 = vmatprep.subr.mxu0 0.0
    %115 = vmatpush1.msra.mxu0 0.0
    %116 = vmatprep.subr.mxu0 0.0
    %117 = vmatpush1.msra.mxu0 0.0
    %118 = vmatprep.subr.mxu0 0.0
    %119 = vmatpush1.msra.mxu0 0.0
    %120 = vmatprep.subr.mxu0 0.0
    %121 = vmatpush1.msra.mxu0 0.0
    %122 = vmatprep.subr.mxu0 0.0
    %123 = vmatpush1.msra.mxu0 0.0
    %124 = vmatprep.subr.mxu0 0.0
    %125 = vmatpush1.msra.mxu0 0.0
    %126 = vmatprep.subr.mxu0 0.0
    %127 = vmatpush1.msra.mxu0 0.0
    %128 = vmatprep.subr.mxu0 0.0
    %129 = vmatpush1.msra.mxu0 0.0
    %130 = vmatprep.subr.mxu0 0.0
    %131 = vmatpush1.msra.mxu0 0.0
    %132 = vmatprep.subr.mxu0 0.0
    %133 = vmatpush1.msra.mxu0 0.0
    %134 = vmatprep.subr.mxu0 0.0
    %135 = vmatpush1.msra.mxu0 0.0
    %136 = vmatprep.subr.mxu0 0.0
    %137 = vmatpush1.msra.mxu0 0.0
    %138 = vmatprep.subr.mxu0 0.0
    %139 = vmatpush1.msra.mxu0 0.0
    %140 = vmatprep.subr.mxu0 0.0
    %141 = vmatpush1.msra.mxu0 0.0
    %142 = vmatprep.subr.mxu0 0.0
    %143 = vmatpush1.msra.mxu0 0.0
    %144 = vmatprep.subr.mxu0 0.0
    %145 = vmatpush1.msra.mxu0 0.0
    %146 = vmatprep.subr.mxu0 0.0
    %147 = vmatpush1.msra.mxu0 0.0
    %148 = vmatprep.subr.mxu0 0.0
    %149 = vmatpush1.msra.mxu0 0.0
    %150 = vmatprep.mubr.f32.mxu0 0.0
    %151 = vmatmul.mubr.f32.gmra.mrb[0].mxu0 %v84
    %v152 = vpop.f32.mrb[0].mxu0
    %v153 = vadd.f32 %v80, %v152
    %v154 = vpop.f32.mrb[0].mxu0
    %155 = vdwg.mxu0
    %v156 = vld [vmem:[%s7] sm:$0xf]
    %v157 = vld [vmem:[%s8] sm:$0x1]
    %v159 = vlaneseq
    %v160 = vshrl.u32 %v159, 7
    %v161 = vsub.s32 0, %v160
    %v162 = vrot.slane %v157, %v161
    %vm164 = vcmask 31744
    %v166 = vsel %vm164, %v61, 0
    %v169 = vsel %vm164, %v62, 0
    %vm171 = vcmask 1043456
    %v173 = vsel %vm171, %v156, 0
    %175 = vmatprep.subr.mxu0 0.0
    %176 = vmatpush1.msra.mxu0 %v173
    %177 = vmatprep.subr.mxu0 0.0
    %178 = vmatpush1.msra.mxu0 0.0
    %179 = vmatprep.subr.mxu0 0.0
    %180 = vmatpush1.msra.mxu0 0.0
    %181 = vmatprep.subr.mxu0 0.0
    %182 = vmatpush1.msra.mxu0 0.0
    %183 = vmatprep.subr.mxu0 0.0
    %184 = vmatpush1.msra.mxu0 0.0
    %185 = vmatprep.subr.mxu0 0.0
    %186 = vmatpush1.msra.mxu0 0.0
    %187 = vmatprep.subr.mxu0 0.0
    %188 = vmatpush1.msra.mxu0 0.0
    %189 = vmatprep.subr.mxu0 0.0
    %190 = vmatpush1.msra.mxu0 0.0
    %191 = vmatprep.subr.mxu0 0.0
    %192 = vmatpush1.msra.mxu0 0.0
    %193 = vmatprep.subr.mxu0 0.0
    %194 = vmatpush1.msra.mxu0 0.0
    %195 = vmatprep.subr.mxu0 0.0
    %196 = vmatpush1.msra.mxu0 0.0
    %197 = vmatprep.subr.mxu0 0.0
    %198 = vmatpush1.msra.mxu0 0.0
    %199 = vmatprep.subr.mxu0 0.0
    %200 = vmatpush1.msra.mxu0 0.0
    %201 = vmatprep.subr.mxu0 0.0
    %202 = vmatpush1.msra.mxu0 0.0
    %203 = vmatprep.subr.mxu0 0.0
    %204 = vmatpush1.msra.mxu0 0.0
    %205 = vmatprep.subr.mxu0 0.0
    %206 = vmatpush1.msra.mxu0 0.0
    %207 = vmatprep.subr.mxu0 0.0
    %208 = vmatpush1.msra.mxu0 0.0
    %209 = vmatprep.subr.mxu0 0.0
    %210 = vmatpush1.msra.mxu0 0.0
    %211 = vmatprep.subr.mxu0 0.0
    %212 = vmatpush1.msra.mxu0 0.0
    %213 = vmatprep.subr.mxu0 0.0
    %214 = vmatpush1.msra.mxu0 0.0
    %215 = vmatprep.subr.mxu0 0.0
    %216 = vmatpush1.msra.mxu0 0.0
    %217 = vmatprep.subr.mxu0 0.0
    %218 = vmatpush1.msra.mxu0 0.0
    %219 = vmatprep.subr.mxu0 0.0
    %220 = vmatpush1.msra.mxu0 0.0
    %221 = vmatprep.subr.mxu0 0.0
    %222 = vmatpush1.msra.mxu0 0.0
    %223 = vmatprep.subr.mxu0 0.0
    %224 = vmatpush1.msra.mxu0 0.0
    %225 = vmatprep.subr.mxu0 0.0
    %226 = vmatpush1.msra.mxu0 0.0
    %227 = vmatprep.subr.mxu0 0.0
    %228 = vmatpush1.msra.mxu0 0.0
    %229 = vmatprep.subr.mxu0 0.0
    %230 = vmatpush1.msra.mxu0 0.0
    %231 = vmatprep.subr.mxu0 0.0
    %232 = vmatpush1.msra.mxu0 0.0
    %233 = vmatprep.subr.mxu0 0.0
    %234 = vmatpush1.msra.mxu0 0.0
    %235 = vmatprep.subr.mxu0 0.0
    %236 = vmatpush1.msra.mxu0 0.0
    %237 = vmatprep.subr.mxu0 0.0
    %238 = vmatpush1.msra.mxu0 0.0
    %239 = vmatprep.mubr.f32.mxu0 0.0
    %240 = vmatmul.mubr.f32.gmra.mrb[0].mxu0 %v166
    %v241 = vpop.f32.mrb[0].mxu0
    %v242 = vadd.f32 %v162, %v241
    %v243 = vpop.f32.mrb[0].mxu0
    %244 = vmatprep.mubr.f32.mxu0 0.0
    %245 = vmatmul.mubr.f32.gmra.mrb[0].mxu0 %v169
    %v246 = vpop.f32.mrb[0].mxu0
    %v247 = vadd.f32 %v162, %v246
    %v248 = vpop.f32.mrb[0].mxu0
    %249 = vdwg.mxu0
    %v250 = vld [vmem:[%s9] sm:$0xff]
    %v251 = vld [vmem:[%s10] sm:$0x1]
    %v253 = vlaneseq
    %v254 = vshrl.u32 %v253, 7
    %v255 = vsub.s32 0, %v254
    %v256 = vrot.slane %v251, %v255
    %258 = vmatprep.subr.mxu0 0.0
    %259 = vmatpush1.msra.mxu0 %v250
    %260 = vmatprep.subr.mxu0 0.0
    %261 = vmatpush1.msra.mxu0 0.0
    %262 = vmatprep.subr.mxu0 0.0
    %263 = vmatpush1.msra.mxu0 0.0
    %264 = vmatprep.subr.mxu0 0.0
    %265 = vmatpush1.msra.mxu0 0.0
    %266 = vmatprep.subr.mxu0 0.0
    %267 = vmatpush1.msra.mxu0 0.0
    %268 = vmatprep.subr.mxu0 0.0
    %269 = vmatpush1.msra.mxu0 0.0
    %270 = vmatprep.subr.mxu0 0.0
    %271 = vmatpush1.msra.mxu0 0.0
    %272 = vmatprep.subr.mxu0 0.0
    %273 = vmatpush1.msra.mxu0 0.0
    %274 = vmatprep.subr.mxu0 0.0
    %275 = vmatpush1.msra.mxu0 0.0
    %276 = vmatprep.subr.mxu0 0.0
    %277 = vmatpush1.msra.mxu0 0.0
    %278 = vmatprep.subr.mxu0 0.0
    %279 = vmatpush1.msra.mxu0 0.0
    %280 = vmatprep.subr.mxu0 0.0
    %281 = vmatpush1.msra.mxu0 0.0
    %282 = vmatprep.subr.mxu0 0.0
    %283 = vmatpush1.msra.mxu0 0.0
    %284 = vmatprep.subr.mxu0 0.0
    %285 = vmatpush1.msra.mxu0 0.0
    %286 = vmatprep.subr.mxu0 0.0
    %287 = vmatpush1.msra.mxu0 0.0
    %288 = vmatprep.subr.mxu0 0.0
    %289 = vmatpush1.msra.mxu0 0.0
    %290 = vmatprep.subr.mxu0 0.0
    %291 = vmatpush1.msra.mxu0 0.0
    %292 = vmatprep.subr.mxu0 0.0
    %293 = vmatpush1.msra.mxu0 0.0
    %294 = vmatprep.subr.mxu0 0.0
    %295 = vmatpush1.msra.mxu0 0.0
    %296 = vmatprep.subr.mxu0 0.0
    %297 = vmatpush1.msra.mxu0 0.0
    %298 = vmatprep.subr.mxu0 0.0
    %299 = vmatpush1.msra.mxu0 0.0
    %300 = vmatprep.subr.mxu0 0.0
    %301 = vmatpush1.msra.mxu0 0.0
    %302 = vmatprep.subr.mxu0 0.0
    %303 = vmatpush1.msra.mxu0 0.0
    %304 = vmatprep.subr.mxu0 0.0
    %305 = vmatpush1.msra.mxu0 0.0
    %306 = vmatprep.subr.mxu0 0.0
    %307 = vmatpush1.msra.mxu0 0.0
    %308 = vmatprep.subr.mxu0 0.0
    %309 = vmatpush1.msra.mxu0 0.0
    %310 = vmatprep.subr.mxu0 0.0
    %311 = vmatpush1.msra.mxu0 0.0
    %312 = vmatprep.subr.mxu0 0.0
    %313 = vmatpush1.msra.mxu0 0.0
    %314 = vmatprep.subr.mxu0 0.0
    %315 = vmatpush1.msra.mxu0 0.0
    %316 = vmatprep.subr.mxu0 0.0
    %317 = vmatpush1.msra.mxu0 0.0
    %318 = vmatprep.subr.mxu0 0.0
    %319 = vmatpush1.msra.mxu0 0.0
    %320 = vmatprep.subr.mxu0 0.0
    %321 = vmatpush1.msra.mxu0 0.0
    %322 = vmatprep.mubr.f32.mxu0 0.0
    %323 = vmatmul.mubr.f32.gmra.mrb[0].mxu0 %v84
    %v324 = vpop.f32.mrb[0].mxu0
    %v325 = vadd.f32 %v256, %v324
    %v326 = vpop.f32.mrb[0].mxu0
    %327 = vdwg.mxu0
    %v328 = vld [vmem:[%s11] sm:$0xff]
    %v329 = vld [vmem:[%s12] sm:$0x1]
    %v331 = vlaneseq
    %v332 = vshrl.u32 %v331, 7
    %v333 = vsub.s32 0, %v332
    %v334 = vrot.slane %v329, %v333
    %336 = vmatprep.subr.mxu0 0.0
    %337 = vmatpush1.msra.mxu0 %v328
    %338 = vmatprep.subr.mxu0 0.0
    %339 = vmatpush1.msra.mxu0 0.0
    %340 = vmatprep.subr.mxu0 0.0
    %341 = vmatpush1.msra.mxu0 0.0
    %342 = vmatprep.subr.mxu0 0.0
    %343 = vmatpush1.msra.mxu0 0.0
    %344 = vmatprep.subr.mxu0 0.0
    %345 = vmatpush1.msra.mxu0 0.0
    %346 = vmatprep.subr.mxu0 0.0
    %347 = vmatpush1.msra.mxu0 0.0
    %348 = vmatprep.subr.mxu0 0.0
    %349 = vmatpush1.msra.mxu0 0.0
    %350 = vmatprep.subr.mxu0 0.0
    %351 = vmatpush1.msra.mxu0 0.0
    %352 = vmatprep.subr.mxu0 0.0
    %353 = vmatpush1.msra.mxu0 0.0
    %354 = vmatprep.subr.mxu0 0.0
    %355 = vmatpush1.msra.mxu0 0.0
    %356 = vmatprep.subr.mxu0 0.0
    %357 = vmatpush1.msra.mxu0 0.0
    %358 = vmatprep.subr.mxu0 0.0
    %359 = vmatpush1.msra.mxu0 0.0
    %360 = vmatprep.subr.mxu0 0.0
    %361 = vmatpush1.msra.mxu0 0.0
    %362 = vmatprep.subr.mxu0 0.0
    %363 = vmatpush1.msra.mxu0 0.0
    %364 = vmatprep.subr.mxu0 0.0
    %365 = vmatpush1.msra.mxu0 0.0
    %366 = vmatprep.subr.mxu0 0.0
    %367 = vmatpush1.msra.mxu0 0.0
    %368 = vmatprep.subr.mxu0 0.0
    %369 = vmatpush1.msra.mxu0 0.0
    %370 = vmatprep.subr.mxu0 0.0
    %371 = vmatpush1.msra.mxu0 0.0
    %372 = vmatprep.subr.mxu0 0.0
    %373 = vmatpush1.msra.mxu0 0.0
    %374 = vmatprep.subr.mxu0 0.0
    %375 = vmatpush1.msra.mxu0 0.0
    %376 = vmatprep.subr.mxu0 0.0
    %377 = vmatpush1.msra.mxu0 0.0
    %378 = vmatprep.subr.mxu0 0.0
    %379 = vmatpush1.msra.mxu0 0.0
    %380 = vmatprep.subr.mxu0 0.0
    %381 = vmatpush1.msra.mxu0 0.0
    %382 = vmatprep.subr.mxu0 0.0
    %383 = vmatpush1.msra.mxu0 0.0
    %384 = vmatprep.subr.mxu0 0.0
    %385 = vmatpush1.msra.mxu0 0.0
    %386 = vmatprep.subr.mxu0 0.0
    %387 = vmatpush1.msra.mxu0 0.0
    %388 = vmatprep.subr.mxu0 0.0
    %389 = vmatpush1.msra.mxu0 0.0
    %390 = vmatprep.subr.mxu0 0.0
    %391 = vmatpush1.msra.mxu0 0.0
    %392 = vmatprep.subr.mxu0 0.0
    %393 = vmatpush1.msra.mxu0 0.0
    %394 = vmatprep.subr.mxu0 0.0
    %395 = vmatpush1.msra.mxu0 0.0
    %396 = vmatprep.subr.mxu0 0.0
    %397 = vmatpush1.msra.mxu0 0.0
    %398 = vmatprep.subr.mxu0 0.0
    %399 = vmatpush1.msra.mxu0 0.0
    %400 = vmatprep.mubr.f32.mxu0 0.0
    %401 = vmatmul.mubr.f32.gmra.mrb[0].mxu0 %v84
    %v402 = vpop.f32.mrb[0].mxu0
    %v403 = vadd.f32 %v334, %v402
    %v404 = vpop.f32.mrb[0].mxu0
    %405 = vdwg.mxu0
    %v406 = vld [vmem:[%s13] sm:$0xf]
    %v407 = vld [vmem:[%s14] sm:$0x1]
    %v409 = vlaneseq
    %v410 = vshrl.u32 %v409, 7
    %v411 = vsub.s32 0, %v410
    %v412 = vrot.slane %v407, %v411
    %v415 = vsel %vm171, %v406, 0
    %417 = vmatprep.subr.mxu0 0.0
    %418 = vmatpush1.msra.mxu0 %v415
    %419 = vmatprep.subr.mxu0 0.0
    %420 = vmatpush1.msra.mxu0 0.0
    %421 = vmatprep.subr.mxu0 0.0
    %422 = vmatpush1.msra.mxu0 0.0
    %423 = vmatprep.subr.mxu0 0.0
    %424 = vmatpush1.msra.mxu0 0.0
    %425 = vmatprep.subr.mxu0 0.0
    %426 = vmatpush1.msra.mxu0 0.0
    %427 = vmatprep.subr.mxu0 0.0
    %428 = vmatpush1.msra.mxu0 0.0
    %429 = vmatprep.subr.mxu0 0.0
    %430 = vmatpush1.msra.mxu0 0.0
    %431 = vmatprep.subr.mxu0 0.0
    %432 = vmatpush1.msra.mxu0 0.0
    %433 = vmatprep.subr.mxu0 0.0
    %434 = vmatpush1.msra.mxu0 0.0
    %435 = vmatprep.subr.mxu0 0.0
    %436 = vmatpush1.msra.mxu0 0.0
    %437 = vmatprep.subr.mxu0 0.0
    %438 = vmatpush1.msra.mxu0 0.0
    %439 = vmatprep.subr.mxu0 0.0
    %440 = vmatpush1.msra.mxu0 0.0
    %441 = vmatprep.subr.mxu0 0.0
    %442 = vmatpush1.msra.mxu0 0.0
    %443 = vmatprep.subr.mxu0 0.0
    %444 = vmatpush1.msra.mxu0 0.0
    %445 = vmatprep.subr.mxu0 0.0
    %446 = vmatpush1.msra.mxu0 0.0
    %447 = vmatprep.subr.mxu0 0.0
    %448 = vmatpush1.msra.mxu0 0.0
    %449 = vmatprep.subr.mxu0 0.0
    %450 = vmatpush1.msra.mxu0 0.0
    %451 = vmatprep.subr.mxu0 0.0
    %452 = vmatpush1.msra.mxu0 0.0
    %453 = vmatprep.subr.mxu0 0.0
    %454 = vmatpush1.msra.mxu0 0.0
    %455 = vmatprep.subr.mxu0 0.0
    %456 = vmatpush1.msra.mxu0 0.0
    %457 = vmatprep.subr.mxu0 0.0
    %458 = vmatpush1.msra.mxu0 0.0
    %459 = vmatprep.subr.mxu0 0.0
    %460 = vmatpush1.msra.mxu0 0.0
    %461 = vmatprep.subr.mxu0 0.0
    %462 = vmatpush1.msra.mxu0 0.0
    %463 = vmatprep.subr.mxu0 0.0
    %464 = vmatpush1.msra.mxu0 0.0
    %465 = vmatprep.subr.mxu0 0.0
    %466 = vmatpush1.msra.mxu0 0.0
    %467 = vmatprep.subr.mxu0 0.0
    %468 = vmatpush1.msra.mxu0 0.0
    %469 = vmatprep.subr.mxu0 0.0
    %470 = vmatpush1.msra.mxu0 0.0
    %471 = vmatprep.subr.mxu0 0.0
    %472 = vmatpush1.msra.mxu0 0.0
    %473 = vmatprep.subr.mxu0 0.0
    %474 = vmatpush1.msra.mxu0 0.0
    %475 = vmatprep.subr.mxu0 0.0
    %476 = vmatpush1.msra.mxu0 0.0
    %477 = vmatprep.subr.mxu0 0.0
    %478 = vmatpush1.msra.mxu0 0.0
    %479 = vmatprep.subr.mxu0 0.0
    %480 = vmatpush1.msra.mxu0 0.0
    %481 = vmatprep.mubr.f32.mxu0 0.0
    %482 = vmatmul.mubr.f32.gmra.mrb[0].mxu0 %v166
    %v483 = vpop.f32.mrb[0].mxu0
    %v484 = vadd.f32 %v412, %v483
    %v485 = vpop.f32.mrb[0].mxu0
    %486 = vmatprep.mubr.f32.mxu0 0.0
    %487 = vmatmul.mubr.f32.gmra.mrb[0].mxu0 %v169
    %v488 = vpop.f32.mrb[0].mxu0
    %v489 = vadd.f32 %v412, %v488
    %v490 = vpop.f32.mrb[0].mxu0
    %491 = vdwg.mxu0
    %v493 = vsel %vm82, %v71, 0
    %v496 = vsel %vm82, %v72, 0
    %498 = vmatprep.subr.mxu0 0.0
    %499 = vmatpush1.msra.mxu0 %v403
    %500 = vmatprep.subr.mxu0 0.0
    %501 = vmatpush1.msra.mxu0 0.0
    %502 = vmatprep.subr.mxu0 0.0
    %503 = vmatpush1.msra.mxu0 0.0
    %504 = vmatprep.subr.mxu0 0.0
    %505 = vmatpush1.msra.mxu0 0.0
    %506 = vmatprep.subr.mxu0 0.0
    %507 = vmatpush1.msra.mxu0 0.0
    %508 = vmatprep.subr.mxu0 0.0
    %509 = vmatpush1.msra.mxu0 0.0
    %510 = vmatprep.subr.mxu0 0.0
    %511 = vmatpush1.msra.mxu0 0.0
    %512 = vmatprep.subr.mxu0 0.0
    %513 = vmatpush1.msra.mxu0 0.0
    %514 = vmatprep.subr.mxu0 0.0
    %515 = vmatpush1.msra.mxu0 0.0
    %516 = vmatprep.subr.mxu0 0.0
    %517 = vmatpush1.msra.mxu0 0.0
    %518 = vmatprep.subr.mxu0 0.0
    %519 = vmatpush1.msra.mxu0 0.0
    %520 = vmatprep.subr.mxu0 0.0
    %521 = vmatpush1.msra.mxu0 0.0
    %522 = vmatprep.subr.mxu0 0.0
    %523 = vmatpush1.msra.mxu0 0.0
    %524 = vmatprep.subr.mxu0 0.0
    %525 = vmatpush1.msra.mxu0 0.0
    %526 = vmatprep.subr.mxu0 0.0
    %527 = vmatpush1.msra.mxu0 0.0
    %528 = vmatprep.subr.mxu0 0.0
    %529 = vmatpush1.msra.mxu0 0.0
    %530 = vmatprep.subr.mxu0 0.0
    %531 = vmatpush1.msra.mxu0 0.0
    %532 = vmatprep.subr.mxu0 0.0
    %533 = vmatpush1.msra.mxu0 0.0
    %534 = vmatprep.subr.mxu0 0.0
    %535 = vmatpush1.msra.mxu0 0.0
    %536 = vmatprep.subr.mxu0 0.0
    %537 = vmatpush1.msra.mxu0 0.0
    %538 = vmatprep.subr.mxu0 0.0
    %539 = vmatpush1.msra.mxu0 0.0
    %540 = vmatprep.subr.mxu0 0.0
    %541 = vmatpush1.msra.mxu0 0.0
    %542 = vmatprep.subr.mxu0 0.0
    %543 = vmatpush1.msra.mxu0 0.0
    %544 = vmatprep.subr.mxu0 0.0
    %545 = vmatpush1.msra.mxu0 0.0
    %546 = vmatprep.subr.mxu0 0.0
    %547 = vmatpush1.msra.mxu0 0.0
    %548 = vmatprep.subr.mxu0 0.0
    %549 = vmatpush1.msra.mxu0 0.0
    %550 = vmatprep.subr.mxu0 0.0
    %551 = vmatpush1.msra.mxu0 0.0
    %552 = vmatprep.subr.mxu0 0.0
    %553 = vmatpush1.msra.mxu0 0.0
    %554 = vmatprep.subr.mxu0 0.0
    %555 = vmatpush1.msra.mxu0 0.0
    %556 = vmatprep.subr.mxu0 0.0
    %557 = vmatpush1.msra.mxu0 0.0
    %558 = vmatprep.subr.mxu0 0.0
    %559 = vmatpush1.msra.mxu0 0.0
    %560 = vmatprep.subr.mxu0 0.0
    %561 = vmatpush1.msra.mxu0 0.0
    %562 = vmatprep.mubr.f32.mxu0 0.0
    %563 = vmatmul.mubr.f32.gmra.mrb[0].mxu0 %v493
    %v564 = vpop.f32.mrb[0].mxu0
    %v565 = vadd.f32 0.0, %v564
    %v566 = vpop.f32.mrb[0].mxu0
    %567 = vmatprep.mubr.f32.mxu0 0.0
    %568 = vmatmul.mubr.f32.gmra.mrb[0].mxu0 %v496
    %v569 = vpop.f32.mrb[0].mxu0
    %v570 = vadd.f32 0.0, %v569
    %v571 = vpop.f32.mrb[0].mxu0
    %572 = vdwg.mxu0
    %v574 = vsel %vm82, %v65, 0
    %v577 = vsel %vm82, %v66, 0
    %579 = vmatprep.subr.mxu0 0.0
    %580 = vmatpush1.msra.mxu0 %v325
    %581 = vmatprep.subr.mxu0 0.0
    %582 = vmatpush1.msra.mxu0 0.0
    %583 = vmatprep.subr.mxu0 0.0
    %584 = vmatpush1.msra.mxu0 0.0
    %585 = vmatprep.subr.mxu0 0.0
    %586 = vmatpush1.msra.mxu0 0.0
    %587 = vmatprep.subr.mxu0 0.0
    %588 = vmatpush1.msra.mxu0 0.0
    %589 = vmatprep.subr.mxu0 0.0
    %590 = vmatpush1.msra.mxu0 0.0
    %591 = vmatprep.subr.mxu0 0.0
    %592 = vmatpush1.msra.mxu0 0.0
    %593 = vmatprep.subr.mxu0 0.0
    %594 = vmatpush1.msra.mxu0 0.0
    %595 = vmatprep.subr.mxu0 0.0
    %596 = vmatpush1.msra.mxu0 0.0
    %597 = vmatprep.subr.mxu0 0.0
    %598 = vmatpush1.msra.mxu0 0.0
    %599 = vmatprep.subr.mxu0 0.0
    %600 = vmatpush1.msra.mxu0 0.0
    %601 = vmatprep.subr.mxu0 0.0
    %602 = vmatpush1.msra.mxu0 0.0
    %603 = vmatprep.subr.mxu0 0.0
    %604 = vmatpush1.msra.mxu0 0.0
    %605 = vmatprep.subr.mxu0 0.0
    %606 = vmatpush1.msra.mxu0 0.0
    %607 = vmatprep.subr.mxu0 0.0
    %608 = vmatpush1.msra.mxu0 0.0
    %609 = vmatprep.subr.mxu0 0.0
    %610 = vmatpush1.msra.mxu0 0.0
    %611 = vmatprep.subr.mxu0 0.0
    %612 = vmatpush1.msra.mxu0 0.0
    %613 = vmatprep.subr.mxu0 0.0
    %614 = vmatpush1.msra.mxu0 0.0
    %615 = vmatprep.subr.mxu0 0.0
    %616 = vmatpush1.msra.mxu0 0.0
    %617 = vmatprep.subr.mxu0 0.0
    %618 = vmatpush1.msra.mxu0 0.0
    %619 = vmatprep.subr.mxu0 0.0
    %620 = vmatpush1.msra.mxu0 0.0
    %621 = vmatprep.subr.mxu0 0.0
    %622 = vmatpush1.msra.mxu0 0.0
    %623 = vmatprep.subr.mxu0 0.0
    %624 = vmatpush1.msra.mxu0 0.0
    %625 = vmatprep.subr.mxu0 0.0
    %626 = vmatpush1.msra.mxu0 0.0
    %627 = vmatprep.subr.mxu0 0.0
    %628 = vmatpush1.msra.mxu0 0.0
    %629 = vmatprep.subr.mxu0 0.0
    %630 = vmatpush1.msra.mxu0 0.0
    %631 = vmatprep.subr.mxu0 0.0
    %632 = vmatpush1.msra.mxu0 0.0
    %633 = vmatprep.subr.mxu0 0.0
    %634 = vmatpush1.msra.mxu0 0.0
    %635 = vmatprep.subr.mxu0 0.0
    %636 = vmatpush1.msra.mxu0 0.0
    %637 = vmatprep.subr.mxu0 0.0
    %638 = vmatpush1.msra.mxu0 0.0
    %639 = vmatprep.subr.mxu0 0.0
    %640 = vmatpush1.msra.mxu0 0.0
    %641 = vmatprep.subr.mxu0 0.0
    %642 = vmatpush1.msra.mxu0 0.0
    %643 = vmatprep.mubr.f32.mxu0 0.0
    %644 = vmatmul.mubr.f32.gmra.mrb[0].mxu0 %v574
    %v645 = vpop.f32.mrb[0].mxu0
    %v646 = vadd.f32 %v565, %v645
    %v647 = vpop.f32.mrb[0].mxu0
    %648 = vmatprep.mubr.f32.mxu0 0.0
    %649 = vmatmul.mubr.f32.gmra.mrb[0].mxu0 %v577
    %v650 = vpop.f32.mrb[0].mxu0
    %v651 = vadd.f32 %v570, %v650
    %v652 = vpop.f32.mrb[0].mxu0
    %653 = vdwg.mxu0
    %v654 = vadd.f32 %v646, %v484
    %v655 = vadd.f32 %v651, %v489
    %v656 = vld [vmem:[%s15] sm:$0x1]
    %v658 = vlaneseq
    %v659 = vshrl.u32 %v658, 7
    %v660 = vsub.s32 0, %v659
    %v661 = vrot.slane %v656, %v660
    %v663 = vadd.f32 %v654, %v661
    %v664 = vadd.f32 %v655, %v661
    %vm665 = vcmp.gt.f32.partialorder %v663, 0.0
    %vm666 = vcmp.gt.f32.partialorder %v664, 0.0
    %v667 = vmul.f32 %v663, 0.2
    %v668 = vmul.f32 %v664, 0.2
    %v669 = vsel %vm665, %v663, %v667
    %v670 = vsel %vm666, %v664, %v668
    %v671 = vsel %vm82, %v669, -inf
    %v672 = vsel %vm82, %v670, -inf
    %v673 = vmax.f32 %v671, %v672
    %v674 = vrot.slane %v673, 4
    %v675 = vmax.f32 %v673, %v674
    %v676 = vrot.slane %v675, 2
    %v677 = vmax.f32 %v675, %v676
    %v678 = vrot.slane %v677, 1
    %v679 = vmax.f32 %v677, %v678
    %v680 = vsub.f32 %v669, %v679
    %v681 = vsub.f32 %v670, %v679
    %v682 = vmul.f32 %v680, 1.442695
    %v683 = vpow.pop %v682
    %v684 = vmul.f32 %v681, 1.442695
    %v685 = vpow.pop %v684
    %vm686 = vcmask 130048
    %v688 = vsel %vm686, %v68, 0
    %690 = vmatprep.subr.mxu0 0.0
    %691 = vmatpush1.msra.mxu0 %v683
    %692 = vmatprep.subr.mxu0 0.0
    %693 = vmatpush1.msra.mxu0 %v685
    %694 = vmatprep.subr.mxu0 0.0
    %695 = vmatpush1.msra.mxu0 0.0
    %696 = vmatprep.subr.mxu0 0.0
    %697 = vmatpush1.msra.mxu0 0.0
    %698 = vmatprep.subr.mxu0 0.0
    %699 = vmatpush1.msra.mxu0 0.0
    %700 = vmatprep.subr.mxu0 0.0
    %701 = vmatpush1.msra.mxu0 0.0
    %702 = vmatprep.subr.mxu0 0.0
    %703 = vmatpush1.msra.mxu0 0.0
    %704 = vmatprep.subr.mxu0 0.0
    %705 = vmatpush1.msra.mxu0 0.0
    %706 = vmatprep.subr.mxu0 0.0
    %707 = vmatpush1.msra.mxu0 0.0
    %708 = vmatprep.subr.mxu0 0.0
    %709 = vmatpush1.msra.mxu0 0.0
    %710 = vmatprep.subr.mxu0 0.0
    %711 = vmatpush1.msra.mxu0 0.0
    %712 = vmatprep.subr.mxu0 0.0
    %713 = vmatpush1.msra.mxu0 0.0
    %714 = vmatprep.subr.mxu0 0.0
    %715 = vmatpush1.msra.mxu0 0.0
    %716 = vmatprep.subr.mxu0 0.0
    %717 = vmatpush1.msra.mxu0 0.0
    %718 = vmatprep.subr.mxu0 0.0
    %719 = vmatpush1.msra.mxu0 0.0
    %720 = vmatprep.subr.mxu0 0.0
    %721 = vmatpush1.msra.mxu0 0.0
    %722 = vmatprep.subr.mxu0 0.0
    %723 = vmatpush1.msra.mxu0 0.0
    %724 = vmatprep.subr.mxu0 0.0
    %725 = vmatpush1.msra.mxu0 0.0
    %726 = vmatprep.subr.mxu0 0.0
    %727 = vmatpush1.msra.mxu0 0.0
    %728 = vmatprep.subr.mxu0 0.0
    %729 = vmatpush1.msra.mxu0 0.0
    %730 = vmatprep.subr.mxu0 0.0
    %731 = vmatpush1.msra.mxu0 0.0
    %732 = vmatprep.subr.mxu0 0.0
    %733 = vmatpush1.msra.mxu0 0.0
    %734 = vmatprep.subr.mxu0 0.0
    %735 = vmatpush1.msra.mxu0 0.0
    %736 = vmatprep.subr.mxu0 0.0
    %737 = vmatpush1.msra.mxu0 0.0
    %738 = vmatprep.subr.mxu0 0.0
    %739 = vmatpush1.msra.mxu0 0.0
    %740 = vmatprep.subr.mxu0 0.0
    %741 = vmatpush1.msra.mxu0 0.0
    %742 = vmatprep.subr.mxu0 0.0
    %743 = vmatpush1.msra.mxu0 0.0
    %744 = vmatprep.subr.mxu0 0.0
    %745 = vmatpush1.msra.mxu0 0.0
    %746 = vmatprep.subr.mxu0 0.0
    %747 = vmatpush1.msra.mxu0 0.0
    %748 = vmatprep.subr.mxu0 0.0
    %749 = vmatpush1.msra.mxu0 0.0
    %750 = vmatprep.subr.mxu0 0.0
    %751 = vmatpush1.msra.mxu0 0.0
    %752 = vmatprep.subr.mxu0 0.0
    %753 = vmatpush1.msra.mxu0 0.0
    %754 = vmatprep.mubr.f32.mxu0 0.0
    %755 = vmatmul.mubr.f32.gmra.mrb[0].mxu0 %v688
    %v756 = vpop.f32.mrb[0].mxu0
    %v757 = vadd.f32 0.0, %v756
    %v758 = vpop.f32.mrb[0].mxu0
    %759 = vdwg.mxu0
    %760 = vmatprep.subr.mxu0 0.0
    %761 = vmatpush1.msra.mxu0 %v757
    %762 = vmatprep.subr.mxu0 0.0
    %763 = vmatpush1.msra.mxu0 0.0
    %764 = vmatprep.subr.mxu0 0.0
    %765 = vmatpush1.msra.mxu0 0.0
    %766 = vmatprep.subr.mxu0 0.0
    %767 = vmatpush1.msra.mxu0 0.0
    %768 = vmatprep.subr.mxu0 0.0
    %769 = vmatpush1.msra.mxu0 0.0
    %770 = vmatprep.subr.mxu0 0.0
    %771 = vmatpush1.msra.mxu0 0.0
    %772 = vmatprep.subr.mxu0 0.0
    %773 = vmatpush1.msra.mxu0 0.0
    %774 = vmatprep.subr.mxu0 0.0
    %775 = vmatpush1.msra.mxu0 0.0
    %776 = vmatprep.subr.mxu0 0.0
    %777 = vmatpush1.msra.mxu0 0.0
    %778 = vmatprep.subr.mxu0 0.0
    %779 = vmatpush1.msra.mxu0 0.0
    %780 = vmatprep.subr.mxu0 0.0
    %781 = vmatpush1.msra.mxu0 0.0
    %782 = vmatprep.subr.mxu0 0.0
    %783 = vmatpush1.msra.mxu0 0.0
    %784 = vmatprep.subr.mxu0 0.0
    %785 = vmatpush1.msra.mxu0 0.0
    %786 = vmatprep.subr.mxu0 0.0
    %787 = vmatpush1.msra.mxu0 0.0
    %788 = vmatprep.subr.mxu0 0.0
    %789 = vmatpush1.msra.mxu0 0.0
    %790 = vmatprep.subr.mxu0 0.0
    %791 = vmatpush1.msra.mxu0 0.0
    %792 = vmatprep.subr.mxu0 0.0
    %793 = vmatpush1.msra.mxu0 0.0
    %794 = vmatprep.subr.mxu0 0.0
    %795 = vmatpush1.msra.mxu0 0.0
    %796 = vmatprep.subr.mxu0 0.0
    %797 = vmatpush1.msra.mxu0 0.0
    %798 = vmatprep.subr.mxu0 0.0
    %799 = vmatpush1.msra.mxu0 0.0
    %800 = vmatprep.subr.mxu0 0.0
    %801 = vmatpush1.msra.mxu0 0.0
    %802 = vmatprep.subr.mxu0 0.0
    %803 = vmatpush1.msra.mxu0 0.0
    %804 = vmatprep.subr.mxu0 0.0
    %805 = vmatpush1.msra.mxu0 0.0
    %806 = vmatprep.subr.mxu0 0.0
    %807 = vmatpush1.msra.mxu0 0.0
    %808 = vmatprep.subr.mxu0 0.0
    %809 = vmatpush1.msra.mxu0 0.0
    %810 = vmatprep.subr.mxu0 0.0
    %811 = vmatpush1.msra.mxu0 0.0
    %812 = vmatprep.subr.mxu0 0.0
    %813 = vmatpush1.msra.mxu0 0.0
    %814 = vmatprep.subr.mxu0 0.0
    %815 = vmatpush1.msra.mxu0 0.0
    %816 = vmatprep.subr.mxu0 0.0
    %817 = vmatpush1.msra.mxu0 0.0
    %818 = vmatprep.subr.mxu0 0.0
    %819 = vmatpush1.msra.mxu0 0.0
    %820 = vmatprep.subr.mxu0 0.0
    %821 = vmatpush1.msra.mxu0 0.0
    %822 = vmatprep.subr.mxu0 0.0
    %823 = vmatpush1.msra.mxu0 0.0
    %824 = vmatprep.mubr.f32.mxu0 0.0
    %825 = vmatmul.mubr.f32.gmra.mrb[0].mxu0 %v574
    %v826 = vpop.f32.mrb[0].mxu0
    %v827 = vadd.f32 0.0, %v826
    %v828 = vpop.f32.mrb[0].mxu0
    %829 = vmatprep.mubr.f32.mxu0 0.0
    %830 = vmatmul.mubr.f32.gmra.mrb[0].mxu0 %v577
    %v831 = vpop.f32.mrb[0].mxu0
    %v832 = vadd.f32 0.0, %v831
    %v833 = vpop.f32.mrb[0].mxu0
    %834 = vdwg.mxu0
    %v835 = vrcp.pop %v827
    %v836 = vrcp.pop %v832
    %v837 = vmul.f32 %v683, %v835
    %v838 = vmul.f32 %v685, %v836
    %839 = vmatprep.subr.mxu0 0.0
    %840 = vmatpush1.msra.mxu0 %v153
    %841 = vmatprep.subr.mxu0 0.0
    %842 = vmatpush1.msra.mxu0 0.0
    %843 = vmatprep.subr.mxu0 0.0
    %844 = vmatpush1.msra.mxu0 0.0
    %845 = vmatprep.subr.mxu0 0.0
    %846 = vmatpush1.msra.mxu0 0.0
    %847 = vmatprep.subr.mxu0 0.0
    %848 = vmatpush1.msra.mxu0 0.0
    %849 = vmatprep.subr.mxu0 0.0
    %850 = vmatpush1.msra.mxu0 0.0
    %851 = vmatprep.subr.mxu0 0.0
    %852 = vmatpush1.msra.mxu0 0.0
    %853 = vmatprep.subr.mxu0 0.0
    %854 = vmatpush1.msra.mxu0 0.0
    %855 = vmatprep.subr.mxu0 0.0
    %856 = vmatpush1.msra.mxu0 0.0
    %857 = vmatprep.subr.mxu0 0.0
    %858 = vmatpush1.msra.mxu0 0.0
    %859 = vmatprep.subr.mxu0 0.0
    %860 = vmatpush1.msra.mxu0 0.0
    %861 = vmatprep.subr.mxu0 0.0
    %862 = vmatpush1.msra.mxu0 0.0
    %863 = vmatprep.subr.mxu0 0.0
    %864 = vmatpush1.msra.mxu0 0.0
    %865 = vmatprep.subr.mxu0 0.0
    %866 = vmatpush1.msra.mxu0 0.0
    %867 = vmatprep.subr.mxu0 0.0
    %868 = vmatpush1.msra.mxu0 0.0
    %869 = vmatprep.subr.mxu0 0.0
    %870 = vmatpush1.msra.mxu0 0.0
    %871 = vmatprep.subr.mxu0 0.0
    %872 = vmatpush1.msra.mxu0 0.0
    %873 = vmatprep.subr.mxu0 0.0
    %874 = vmatpush1.msra.mxu0 0.0
    %875 = vmatprep.subr.mxu0 0.0
    %876 = vmatpush1.msra.mxu0 0.0
    %877 = vmatprep.subr.mxu0 0.0
    %878 = vmatpush1.msra.mxu0 0.0
    %879 = vmatprep.subr.mxu0 0.0
    %880 = vmatpush1.msra.mxu0 0.0
    %881 = vmatprep.subr.mxu0 0.0
    %882 = vmatpush1.msra.mxu0 0.0
    %883 = vmatprep.subr.mxu0 0.0
    %884 = vmatpush1.msra.mxu0 0.0
    %885 = vmatprep.subr.mxu0 0.0
    %886 = vmatpush1.msra.mxu0 0.0
    %887 = vmatprep.subr.mxu0 0.0
    %888 = vmatpush1.msra.mxu0 0.0
    %889 = vmatprep.subr.mxu0 0.0
    %890 = vmatpush1.msra.mxu0 0.0
    %891 = vmatprep.subr.mxu0 0.0
    %892 = vmatpush1.msra.mxu0 0.0
    %893 = vmatprep.subr.mxu0 0.0
    %894 = vmatpush1.msra.mxu0 0.0
    %895 = vmatprep.subr.mxu0 0.0
    %896 = vmatpush1.msra.mxu0 0.0
    %897 = vmatprep.subr.mxu0 0.0
    %898 = vmatpush1.msra.mxu0 0.0
    %899 = vmatprep.subr.mxu0 0.0
    %900 = vmatpush1.msra.mxu0 0.0
    %901 = vmatprep.subr.mxu0 0.0
    %902 = vmatpush1.msra.mxu0 0.0
    %903 = vmatprep.mubr.f32.mxu0 0.0
    %904 = vmatmul.mubr.f32.gmra.mrb[0].mxu0 %v493
    %v905 = vpop.f32.mrb[0].mxu0
    %v906 = vadd.f32 0.0, %v905
    %v907 = vpop.f32.mrb[0].mxu0
    %908 = vmatprep.mubr.f32.mxu0 0.0
    %909 = vmatmul.mubr.f32.gmra.mrb[0].mxu0 %v496
    %v910 = vpop.f32.mrb[0].mxu0
    %v911 = vadd.f32 0.0, %v910
    %v912 = vpop.f32.mrb[0].mxu0
    %913 = vdwg.mxu0
    %v915 = vsel %vm82, %v837, 0
    %v918 = vsel %vm82, %v838, 0
    %920 = vmatprep.subr.mxu0 0.0
    %921 = vmatpush1.msra.mxu0 %v73
    %922 = vmatprep.subr.mxu0 0.0
    %923 = vmatpush1.msra.mxu0 0.0
    %924 = vmatprep.subr.mxu0 0.0
    %925 = vmatpush1.msra.mxu0 0.0
    %926 = vmatprep.subr.mxu0 0.0
    %927 = vmatpush1.msra.mxu0 0.0
    %928 = vmatprep.subr.mxu0 0.0
    %929 = vmatpush1.msra.mxu0 0.0
    %930 = vmatprep.subr.mxu0 0.0
    %931 = vmatpush1.msra.mxu0 0.0
    %932 = vmatprep.subr.mxu0 0.0
    %933 = vmatpush1.msra.mxu0 0.0
    %934 = vmatprep.subr.mxu0 0.0
    %935 = vmatpush1.msra.mxu0 0.0
    %936 = vmatprep.subr.mxu0 0.0
    %937 = vmatpush1.msra.mxu0 0.0
    %938 = vmatprep.subr.mxu0 0.0
    %939 = vmatpush1.msra.mxu0 0.0
    %940 = vmatprep.subr.mxu0 0.0
    %941 = vmatpush1.msra.mxu0 0.0
    %942 = vmatprep.subr.mxu0 0.0
    %943 = vmatpush1.msra.mxu0 0.0
    %944 = vmatprep.subr.mxu0 0.0
    %945 = vmatpush1.msra.mxu0 0.0
    %946 = vmatprep.subr.mxu0 0.0
    %947 = vmatpush1.msra.mxu0 0.0
    %948 = vmatprep.subr.mxu0 0.0
    %949 = vmatpush1.msra.mxu0 0.0
    %950 = vmatprep.subr.mxu0 0.0
    %951 = vmatpush1.msra.mxu0 0.0
    %952 = vmatprep.subr.mxu0 0.0
    %953 = vmatpush1.msra.mxu0 0.0
    %954 = vmatprep.subr.mxu0 0.0
    %955 = vmatpush1.msra.mxu0 0.0
    %956 = vmatprep.subr.mxu0 0.0
    %957 = vmatpush1.msra.mxu0 0.0
    %958 = vmatprep.subr.mxu0 0.0
    %959 = vmatpush1.msra.mxu0 0.0
    %960 = vmatprep.subr.mxu0 0.0
    %961 = vmatpush1.msra.mxu0 0.0
    %962 = vmatprep.subr.mxu0 0.0
    %963 = vmatpush1.msra.mxu0 0.0
    %964 = vmatprep.subr.mxu0 0.0
    %965 = vmatpush1.msra.mxu0 0.0
    %966 = vmatprep.subr.mxu0 0.0
    %967 = vmatpush1.msra.mxu0 0.0
    %968 = vmatprep.subr.mxu0 0.0
    %969 = vmatpush1.msra.mxu0 0.0
    %970 = vmatprep.subr.mxu0 0.0
    %971 = vmatpush1.msra.mxu0 0.0
    %972 = vmatprep.subr.mxu0 0.0
    %973 = vmatpush1.msra.mxu0 0.0
    %974 = vmatprep.subr.mxu0 0.0
    %975 = vmatpush1.msra.mxu0 0.0
    %976 = vmatprep.subr.mxu0 0.0
    %977 = vmatpush1.msra.mxu0 0.0
    %978 = vmatprep.subr.mxu0 0.0
    %979 = vmatpush1.msra.mxu0 0.0
    %980 = vmatprep.subr.mxu0 0.0
    %981 = vmatpush1.msra.mxu0 0.0
    %982 = vmatprep.subr.mxu0 0.0
    %983 = vmatpush1.msra.mxu0 0.0
    %984 = vmatprep.mubr.f32.mxu0 0.0
    %985 = vmatmul.mubr.f32.gmra.mrb[0].mxu0 %v915
    %v986 = vpop.f32.mrb[0].mxu0
    %v987 = vadd.f32 0.0, %v986
    %v988 = vpop.f32.mrb[0].mxu0
    %989 = vmatprep.mubr.f32.mxu0 0.0
    %990 = vmatmul.mubr.f32.gmra.mrb[0].mxu0 %v918
    %v991 = vpop.f32.mrb[0].mxu0
    %v992 = vadd.f32 0.0, %v991
    %v993 = vpop.f32.mrb[0].mxu0
    %994 = vdwg.mxu0
    %v995 = vmul.f32 %v987, %v906
    %v996 = vmul.f32 %v992, %v911
    %997 = vmatprep.subr.mxu0 0.0
    %998 = vmatpush1.msra.mxu0 %v995
    %999 = vmatprep.subr.mxu0 0.0
    %1000 = vmatpush1.msra.mxu0 %v996
    %1001 = vmatprep.subr.mxu0 0.0
    %1002 = vmatpush1.msra.mxu0 0.0
    %1003 = vmatprep.subr.mxu0 0.0
    %1004 = vmatpush1.msra.mxu0 0.0
    %1005 = vmatprep.subr.mxu0 0.0
    %1006 = vmatpush1.msra.mxu0 0.0
    %1007 = vmatprep.subr.mxu0 0.0
    %1008 = vmatpush1.msra.mxu0 0.0
    %1009 = vmatprep.subr.mxu0 0.0
    %1010 = vmatpush1.msra.mxu0 0.0
    %1011 = vmatprep.subr.mxu0 0.0
    %1012 = vmatpush1.msra.mxu0 0.0
    %1013 = vmatprep.subr.mxu0 0.0
    %1014 = vmatpush1.msra.mxu0 0.0
    %1015 = vmatprep.subr.mxu0 0.0
    %1016 = vmatpush1.msra.mxu0 0.0
    %1017 = vmatprep.subr.mxu0 0.0
    %1018 = vmatpush1.msra.mxu0 0.0
    %1019 = vmatprep.subr.mxu0 0.0
    %1020 = vmatpush1.msra.mxu0 0.0
    %1021 = vmatprep.subr.mxu0 0.0
    %1022 = vmatpush1.msra.mxu0 0.0
    %1023 = vmatprep.subr.mxu0 0.0
    %1024 = vmatpush1.msra.mxu0 0.0
    %1025 = vmatprep.subr.mxu0 0.0
    %1026 = vmatpush1.msra.mxu0 0.0
    %1027 = vmatprep.subr.mxu0 0.0
    %1028 = vmatpush1.msra.mxu0 0.0
    %1029 = vmatprep.subr.mxu0 0.0
    %1030 = vmatpush1.msra.mxu0 0.0
    %1031 = vmatprep.subr.mxu0 0.0
    %1032 = vmatpush1.msra.mxu0 0.0
    %1033 = vmatprep.subr.mxu0 0.0
    %1034 = vmatpush1.msra.mxu0 0.0
    %1035 = vmatprep.subr.mxu0 0.0
    %1036 = vmatpush1.msra.mxu0 0.0
    %1037 = vmatprep.subr.mxu0 0.0
    %1038 = vmatpush1.msra.mxu0 0.0
    %1039 = vmatprep.subr.mxu0 0.0
    %1040 = vmatpush1.msra.mxu0 0.0
    %1041 = vmatprep.subr.mxu0 0.0
    %1042 = vmatpush1.msra.mxu0 0.0
    %1043 = vmatprep.subr.mxu0 0.0
    %1044 = vmatpush1.msra.mxu0 0.0
    %1045 = vmatprep.subr.mxu0 0.0
    %1046 = vmatpush1.msra.mxu0 0.0
    %1047 = vmatprep.subr.mxu0 0.0
    %1048 = vmatpush1.msra.mxu0 0.0
    %1049 = vmatprep.subr.mxu0 0.0
    %1050 = vmatpush1.msra.mxu0 0.0
    %1051 = vmatprep.subr.mxu0 0.0
    %1052 = vmatpush1.msra.mxu0 0.0
    %1053 = vmatprep.subr.mxu0 0.0
    %1054 = vmatpush1.msra.mxu0 0.0
    %1055 = vmatprep.subr.mxu0 0.0
    %1056 = vmatpush1.msra.mxu0 0.0
    %1057 = vmatprep.subr.mxu0 0.0
    %1058 = vmatpush1.msra.mxu0 0.0
    %1059 = vmatprep.subr.mxu0 0.0
    %1060 = vmatpush1.msra.mxu0 0.0
    %1061 = vmatprep.mubr.f32.mxu0 0.0
    %1062 = vmatmul.mubr.f32.gmra.mrb[0].mxu0 %v688
    %v1063 = vpop.f32.mrb[0].mxu0
    %v1064 = vadd.f32 %v153, %v1063
    %v1065 = vpop.f32.mrb[0].mxu0
    %1066 = vdwg.mxu0
    %vm1067 = vcmp.gt.f32.partialorder %v1064, 0.0
    %v1068 = vmul.f32 %v1064, 1.442695
    %v1069 = vpow.pop %v1068
    %v1070 = vsub.f32 %v1069, 1.0
    %v1071 = vsel %vm1067, %v1064, %v1070
    %vm1072 = vcmask 261120
    %1073 = vst.msk [vmem:[#allocation2] sm:$0xff] %vm1072, %v1071
    %vm1074 = vcmp.gt.f32.partialorder %v242, 0.0
    %vm1075 = vcmp.gt.f32.partialorder %v247, 0.0
    %v1076 = vmul.f32 %v242, 1.442695
    %v1077 = vpow.pop %v1076
    %v1078 = vmul.f32 %v247, 1.442695
    %v1079 = vpow.pop %v1078
    %v1080 = vsub.f32 %v1077, 1.0
    %v1081 = vsub.f32 %v1079, 1.0
    %v1082 = vsel %vm1074, %v242, %v1080
    %v1083 = vsel %vm1075, %v247, %v1081
    %1084 = vst.msk [vmem:[#allocation4] sm:$0xff] %vm1072, %v1082
    %1085 = vst.msk [vmem:[#allocation4 + $0x8] sm:$0xff] %vm1072, %v1083
    // Predicated region
    $region70: #{tpu_custom_call.1} parent=1 // pred_check
      _
    $region71: #{tpu_custom_call.1} parent=1 // pred_check_branch
      %1087 = sbr.rel (0) target = $region73
    $region72: #{tpu_custom_call.1} parent=1 // pred_region
      %s1089 = ssub.s32 128, 128
      %1090 = vsyncadd [#allocation3], %s1089
      %s1092 = sshll.u32 [#allocation2], 4
      %s1093 = int_to_ptr.vmem [resolvable:$true] %s1092
      %1095 = dma.vmem_to_hbm [thread:$0]  %s1093, 128, %s17, [#allocation3]
    $region73: #{tpu_custom_call.1} parent=1 // pred_fallthru
      _
    // Predicated region
    $region74: #{tpu_custom_call.1} parent=1 // pred_check
      _
    $region75: #{tpu_custom_call.1} parent=1 // pred_check_branch
      %1097 = sbr.rel (0) target = $region77
    $region76: #{tpu_custom_call.1} parent=1 // pred_region
      %s1099 = ssub.s32 256, 256
      %1100 = vsyncadd [#allocation5], %s1099
      %s1101 = sshll.u32 [#allocation4], 4
      %s1102 = int_to_ptr.vmem [resolvable:$true] %s1101
      %1107 = dma.vmem_to_hbm [thread:$0]  %s1102, 256, %s18, [#allocation5], 128, 128, 8
    $region77: #{tpu_custom_call.1} parent=1 // pred_fallthru
      _
    // Predicated region
    $region78: #{tpu_custom_call.1} parent=1 // pred_check
      _
    $region79: #{tpu_custom_call.1} parent=1 // pred_check_branch
      %1109 = sbr.rel (0) target = $region81
    $region80: #{tpu_custom_call.1} parent=1 // pred_region
      %1110 = dma.done [#allocation3], 128
    $region81: #{tpu_custom_call.1} parent=1 // pred_fallthru
      _
    // Predicated region
    $region82: #{tpu_custom_call.1} parent=1 // pred_check
      _
    $region83: #{tpu_custom_call.1} parent=1 // pred_check_branch
      %1112 = sbr.rel (0) target = $region85
    $region84: #{tpu_custom_call.1} parent=1 // pred_region
      %1113 = dma.done [#allocation5], 256
    $region85: #{tpu_custom_call.1} parent=1 // pred_fallthru
      _
    %1114 = vsyncpa [#allocation3], 1
    %1115 = vsyncpa [#allocation5], 1

</llo_original>
